<compile_context>
chip_gen: v7x
topology: tpu7x:2x2x1
jax: 0.10.0
libtpu: 0.0.40
codegen_flags: <defaults>
</compile_context>

<pallas_src>
import functools

import jax
import jax.numpy as jnp
from jax.experimental import pallas as pl
from jax.experimental.pallas import tpu as pltpu


def _round_up(v, m):
  return (v + m - 1) // m * m


def _make_lstm_fc_kernel(L, Bp, H):
  """Builds the single-shot LSTM+FC kernel for static (L, Bp, H)."""
  G = 4 * H  # packed gate width, PyTorch order i|f|g|o

  def kernel(x_ref, wih_ref, whh_ref, b_ref, wfc_ref, bfc_ref,
             out_ref, gx_sc, hs_sc):
    # ---- hoisted input projection: one MXU call over all time steps ----
    # bf16 operands, f32 accumulate; bias added in f32.
    gx_sc[...] = (
        jnp.dot(x_ref[...], wih_ref[...], preferred_element_type=jnp.float32)
        + b_ref[...])

    # Keep W_hh stationary across the recurrence: load it ONCE here.
    # TODO(synk): explicit MXU driving (matmul_push_rhs once + acc_lhs/pop per
    # step) would shave the per-step weight push; kept as a plain dot for
    # portability/safety.
    whh = whh_ref[...]  # (G, G) bf16

    # Lane mask selecting the g-gate (tanh) lanes of the packed gate vector.
    lane = jax.lax.broadcasted_iota(jnp.int32, (Bp, G), 1)
    g_mask = (lane >= 2 * H) & (lane < 3 * H)

    def step(t, carry):
      # h_bf: (Bp, G) bf16 (MXU operand only); c: (Bp, G) f32.
      # Only lanes [0, H) of h/c are meaningful; the rest is bounded garbage.
      h_bf, c = carry
      off = pl.multiple_of(t * Bp, Bp)
      # Recurrent projection: W_hh is zero-padded to (G, G) (exact zeros in
      # bf16), so the garbage lanes of h contribute exactly nothing.
      gates = gx_sc[pl.ds(off, Bp), :] + jnp.dot(
          h_bf, whh, preferred_element_type=jnp.float32)
      # Single EUP pass for all four gates: sigmoid(x) = 0.5*(1 + tanh(x/2)).
      z = jnp.where(g_mask, gates, 0.5 * gates)
      t_act = jnp.tanh(z)
      act = jnp.where(g_mask, t_act, 0.5 * t_act + 0.5)
      # Align f / g / o gates onto lanes [0, H) with XLU lane rotations.
      f_al = pltpu.roll(act, 3 * H, axis=1)
      g_al = pltpu.roll(act, 2 * H, axis=1)
      o_al = pltpu.roll(act, 1 * H, axis=1)
      c_new = f_al * c + act * g_al      # i-gate already sits at lanes [0, H)
      h_new = o_al * jnp.tanh(c_new)     # lanes >= H are bounded garbage
      hs_sc[pl.ds(off, Bp), :] = h_new
      return (h_new.astype(jnp.bfloat16), c_new)

    init = (jnp.zeros((Bp, G), jnp.bfloat16),
            jnp.zeros((Bp, G), jnp.float32))
    _ = jax.lax.fori_loop(0, L, step, init, unroll=True)

    # ---- hoisted FC: one MXU call, lane-dense (padded-to-128) store ----
    out_ref[...] = (
        jnp.dot(hs_sc[...].astype(jnp.bfloat16), wfc_ref[...],
                preferred_element_type=jnp.float32)
        + bfc_ref[...]).astype(out_ref.dtype)

  return kernel


@functools.partial(jax.jit, static_argnames=("num_classes",))
def blitz_lstm_forward(x, params, num_classes=3):
  """x: (B, L, 23*feats_per_agent) float32 -> (B, L, 23, num_classes)."""
  B, L, N = x.shape
  w_ih, w_hh, b_ih, b_hh, w_fc, b_fc = (
      params["w_ih"], params["w_hh"], params["b_ih"], params["b_hh"],
      params["w_fc"], params["b_fc"])
  H = w_hh.shape[1]
  G = 4 * H
  O = w_fc.shape[0]
  assert O == 23 * num_classes

  Bp = _round_up(max(B, 8), 8)     # sublane-aligned batch
  Op = _round_up(O, 128)           # lane-dense output width

  # --- parameter prep (plain JAX glue, runs once under jit) ---
  # bf16 only at the MXU boundary; biases and cell math stay f32.
  wih_bf = w_ih.T.astype(jnp.bfloat16)                                # (N, G)
  whh_pad = (jnp.zeros((G, G), jnp.float32).at[:H].set(w_hh.T)
             .astype(jnp.bfloat16))                                   # (G, G)
  b2 = (b_ih + b_hh).reshape(1, G)                                    # (1, G)
  wfc_pad = (jnp.zeros((G, Op), jnp.float32).at[:H, :O].set(w_fc.T)
             .astype(jnp.bfloat16))                                   # (G, Op)
  bfc_pad = jnp.zeros((1, Op), jnp.float32).at[:, :O].set(b_fc)       # (1, Op)

  # Time-major, batch-padded, flattened input: rows [t*Bp, (t+1)*Bp) = step t.
  x_tm = jnp.transpose(x, (1, 0, 2))                        # (L, B, N)
  x_tm = jnp.pad(x_tm, ((0, 0), (0, Bp - B), (0, 0)))       # (L, Bp, N)
  x_flat = x_tm.reshape(L * Bp, N).astype(jnp.bfloat16)

  kernel = _make_lstm_fc_kernel(L, Bp, H)
  out_flat = pl.pallas_call(
      kernel,
      out_shape=jax.ShapeDtypeStruct((L * Bp, Op), jnp.float32),
      scratch_shapes=[
          pltpu.VMEM((L * Bp, G), jnp.float32),   # hoisted input projection
          pltpu.VMEM((L * Bp, G), jnp.float32),   # per-step hidden states
      ],
  )(x_flat, wih_bf, whh_pad, b2, wfc_pad, bfc_pad)

  out = out_flat.reshape(L, Bp, Op)[:, :B, :O]              # (L, B, O)
  out = jnp.transpose(out, (1, 0, 2))                       # (B, L, O)
  return out.reshape(B, L, 23, num_classes)


def _reference_forward(x, params, num_classes=3):
  """Pure-JAX f32 reference of the PyTorch forward (for validation)."""
  B, L, N = x.shape
  w_ih, w_hh, b_ih, b_hh, w_fc, b_fc = (
      params["w_ih"], params["w_hh"], params["b_ih"], params["b_hh"],
      params["w_fc"], params["b_fc"])
  H = w_hh.shape[1]

  def step(carry, x_t):
    h, c = carry
    gates = x_t @ w_ih.T + b_ih + h @ w_hh.T + b_hh
    i = jax.nn.sigmoid(gates[:, 0 * H:1 * H])
    f = jax.nn.sigmoid(gates[:, 1 * H:2 * H])
    g = jnp.tanh(gates[:, 2 * H:3 * H])
    o = jax.nn.sigmoid(gates[:, 3 * H:4 * H])
    c = f * c + i * g
    h = o * jnp.tanh(c)
    return (h, c), h

  h0 = jnp.zeros((B, H), jnp.float32)
  c0 = jnp.zeros((B, H), jnp.float32)
  _, hs = jax.lax.scan(step, (h0, c0), jnp.transpose(x, (1, 0, 2)))
  hs = jnp.transpose(hs, (1, 0, 2))                   # (B, L, H)
  out = hs @ w_fc.T + b_fc
  return out.reshape(B, L, 23, num_classes)


def init_params(key, feats_per_agent=9, hidden_dim=32, num_classes=3):
  """Deterministic synthetic parameters, same shapes as nn.LSTM / nn.Linear."""
  n_in = 23 * feats_per_agent
  n_out = 23 * num_classes
  ks = jax.random.split(key, 6)
  bound = 1.0 / jnp.sqrt(hidden_dim)
  u = lambda k, shape: jax.random.uniform(k, shape, jnp.float32, -bound, bound)
  return {
      "w_ih": u(ks[0], (4 * hidden_dim, n_in)),
      "w_hh": u(ks[1], (4 * hidden_dim, hidden_dim)),
      "b_ih": u(ks[2], (4 * hidden_dim,)),
      "b_hh": u(ks[3], (4 * hidden_dim,)),
      "w_fc": u(ks[4], (n_out, hidden_dim)),
      "b_fc": u(ks[5], (n_out,)),
  }


if __name__ == "__main__":
  B, L = 2, 8
  feats_per_agent = 9
  hidden_dim = 32
  num_classes = 3
  n_in = 23 * feats_per_agent  # 207

  key = jax.random.PRNGKey(0)
  kx, kp = jax.random.split(key)
  x = jax.random.normal(kx, (B, L, n_in), jnp.float32)
  params = init_params(kp, feats_per_agent, hidden_dim, num_classes)

  out = blitz_lstm_forward(x, params, num_classes=num_classes)
  out = jax.block_until_ready(out)
  assert out.shape == (B, L, 23, num_classes), out.shape

  ref = jax.block_until_ready(_reference_forward(x, params, num_classes))
  # bf16 MXU operands (f32 accumulate): loosened parity vs the f32 reference.
  assert jnp.allclose(out, ref, atol=3e-2, rtol=3e-2), (
      float(jnp.max(jnp.abs(out - ref))))

  print("KERNEL_OK")
</pallas_src>

<mosaic_0001>
module attributes {stable_mosaic.version = 11 : i64} {
  func.func @kernel(%arg0: memref<64x207xbf16, #tpu.memory_space<vmem>>, %arg1: memref<207x128xbf16, #tpu.memory_space<vmem>>, %arg2: memref<128x128xbf16, #tpu.memory_space<vmem>>, %arg3: memref<1x128xf32, #tpu.memory_space<vmem>>, %arg4: memref<128x128xbf16, #tpu.memory_space<vmem>>, %arg5: memref<1x128xf32, #tpu.memory_space<vmem>>, %arg6: memref<64x128xf32, #tpu.memory_space<vmem>>, %arg7: memref<64x128xf32, #tpu.memory_space<vmem>>, %arg8: memref<64x128xf32, #tpu.memory_space<vmem>>) attributes {dimension_semantics = [], scalar_prefetch = 0 : i64, scratch_operands = 2 : i64, tpu.core_type = #tpu.core_type<tc>} {
    %c0 = arith.constant 0 : index
    %c0_0 = arith.constant 0 : index
    %0 = vector.load %arg0[%c0, %c0_0] : memref<64x207xbf16, #tpu.memory_space<vmem>>, vector<64x207xbf16>
    %c0_1 = arith.constant 0 : index
    %c0_2 = arith.constant 0 : index
    %1 = vector.load %arg1[%c0_1, %c0_2] : memref<207x128xbf16, #tpu.memory_space<vmem>>, vector<207x128xbf16>
    %cst = arith.constant dense<0.000000e+00> : vector<64x128xf32>
    %2 = tpu.matmul %0, %1, %cst {dimension_numbers = #tpu.dot_dimension_numbers<[1], [0], [0], [1], [0, 0, 1, 1], [], []>} : vector<64x207xbf16>, vector<207x128xbf16>, vector<64x128xf32> -> vector<64x128xf32>
    %c0_3 = arith.constant 0 : index
    %c0_4 = arith.constant 0 : index
    %3 = vector.load %arg3[%c0_3, %c0_4] : memref<1x128xf32, #tpu.memory_space<vmem>>, vector<1x128xf32>
    %4 = vector.broadcast %3 : vector<1x128xf32> to vector<64x128xf32>
    %5 = arith.addf %2, %4 : vector<64x128xf32>
    %c0_5 = arith.constant 0 : index
    %c0_6 = arith.constant 0 : index
    %6 = vector.load %arg7[%c0_5, %c0_6] : memref<64x128xf32, #tpu.memory_space<vmem>>, vector<64x128xf32>
    tpu.vector_store %arg7[%c0_5, %c0_6], %5 {strides = array<i32>} : memref<64x128xf32, #tpu.memory_space<vmem>>, vector<64x128xf32>,
    %c0_7 = arith.constant 0 : index
    %c0_8 = arith.constant 0 : index
    %7 = vector.load %arg2[%c0_7, %c0_8] : memref<128x128xbf16, #tpu.memory_space<vmem>>, vector<128x128xbf16>
    %8 = tpu.iota {dimensions = array<i32: 1>} : vector<8x128xi32>
    %c64_i32 = arith.constant 64 : i32
    %9 = vector.broadcast %c64_i32 : i32 to vector<8x128xi32>
    %10 = arith.cmpi sge, %8, %9 : vector<8x128xi32>
    %c96_i32 = arith.constant 96 : i32
    %11 = vector.broadcast %c96_i32 : i32 to vector<8x128xi32>
    %12 = arith.cmpi slt, %8, %11 : vector<8x128xi32>
    %13 = arith.andi %10, %12 : vector<8x128xi1>
    %cst_9 = arith.constant 0.000000e+00 : bf16
    %14 = vector.broadcast %cst_9 : bf16 to vector<8x128xbf16>
    %cst_10 = arith.constant 0.000000e+00 : f32
    %15 = vector.broadcast %cst_10 : f32 to vector<8x128xf32>
    %c0_i32 = arith.constant 0 : i32
    %c8_i32 = arith.constant 8 : i32
    %16 = arith.muli %c0_i32, %c8_i32 : i32
    %17 = tpu.assume_multiple %16, 8 : i32
    %18 = arith.index_cast %17 : i32 to index
    %c0_11 = arith.constant 0 : index
    %19 = vector.load %arg7[%18, %c0_11] : memref<64x128xf32, #tpu.memory_space<vmem>>, vector<8x128xf32>
    %cst_12 = arith.constant dense<0.000000e+00> : vector<8x128xf32>
    %20 = tpu.matmul %14, %7, %cst_12 {dimension_numbers = #tpu.dot_dimension_numbers<[1], [0], [0], [1], [0, 0, 1, 1], [], []>} : vector<8x128xbf16>, vector<128x128xbf16>, vector<8x128xf32> -> vector<8x128xf32>
    %21 = arith.addf %19, %20 : vector<8x128xf32>
    %cst_13 = arith.constant 5.000000e-01 : f32
    %22 = vector.broadcast %cst_13 : f32 to vector<8x128xf32>
    %23 = arith.mulf %22, %21 : vector<8x128xf32>
    %24 = arith.select %13, %21, %23 : vector<8x128xi1>, vector<8x128xf32>
    %25 = math.tanh %24 : vector<8x128xf32>
    %cst_14 = arith.constant 5.000000e-01 : f32
    %26 = vector.broadcast %cst_14 : f32 to vector<8x128xf32>
    %27 = arith.mulf %26, %25 : vector<8x128xf32>
    %cst_15 = arith.constant 5.000000e-01 : f32
    %28 = vector.broadcast %cst_15 : f32 to vector<8x128xf32>
    %29 = arith.addf %27, %28 : vector<8x128xf32>
    %30 = arith.select %13, %25, %29 : vector<8x128xi1>, vector<8x128xf32>
    %c96_i32_16 = arith.constant 96 : i32
    %31 = tpu.dynamic_rotate %30 by %c96_i32_16 dim 1 : vector<8x128xf32>, i32 -> vector<8x128xf32>
    %c64_i32_17 = arith.constant 64 : i32
    %32 = tpu.dynamic_rotate %30 by %c64_i32_17 dim 1 : vector<8x128xf32>, i32 -> vector<8x128xf32>
    %c32_i32 = arith.constant 32 : i32
    %33 = tpu.dynamic_rotate %30 by %c32_i32 dim 1 : vector<8x128xf32>, i32 -> vector<8x128xf32>
    %34 = arith.mulf %31, %15 : vector<8x128xf32>
    %35 = arith.mulf %30, %32 : vector<8x128xf32>
    %36 = arith.addf %34, %35 : vector<8x128xf32>
    %37 = math.tanh %36 : vector<8x128xf32>
    %38 = arith.mulf %33, %37 : vector<8x128xf32>
    %39 = arith.index_cast %17 : i32 to index
    %c0_18 = arith.constant 0 : index
    %40 = vector.load %arg8[%39, %c0_18] : memref<64x128xf32, #tpu.memory_space<vmem>>, vector<8x128xf32>
    tpu.vector_store %arg8[%39, %c0_18], %38 {strides = array<i32>} : memref<64x128xf32, #tpu.memory_space<vmem>>, vector<8x128xf32>,
    %41 = arith.truncf %38 : vector<8x128xf32> to vector<8x128xbf16>
    %c1_i32 = arith.constant 1 : i32
    %c8_i32_19 = arith.constant 8 : i32
    %42 = arith.muli %c1_i32, %c8_i32_19 : i32
    %43 = tpu.assume_multiple %42, 8 : i32
    %44 = arith.index_cast %43 : i32 to index
    %c0_20 = arith.constant 0 : index
    %45 = vector.load %arg7[%44, %c0_20] : memref<64x128xf32, #tpu.memory_space<vmem>>, vector<8x128xf32>
    %cst_21 = arith.constant dense<0.000000e+00> : vector<8x128xf32>
    %46 = tpu.matmul %41, %7, %cst_21 {dimension_numbers = #tpu.dot_dimension_numbers<[1], [0], [0], [1], [0, 0, 1, 1], [], []>} : vector<8x128xbf16>, vector<128x128xbf16>, vector<8x128xf32> -> vector<8x128xf32>
    %47 = arith.addf %45, %46 : vector<8x128xf32>
    %cst_22 = arith.constant 5.000000e-01 : f32
    %48 = vector.broadcast %cst_22 : f32 to vector<8x128xf32>
    %49 = arith.mulf %48, %47 : vector<8x128xf32>
    %50 = arith.select %13, %47, %49 : vector<8x128xi1>, vector<8x128xf32>
    %51 = math.tanh %50 : vector<8x128xf32>
    %cst_23 = arith.constant 5.000000e-01 : f32
    %52 = vector.broadcast %cst_23 : f32 to vector<8x128xf32>
    %53 = arith.mulf %52, %51 : vector<8x128xf32>
    %cst_24 = arith.constant 5.000000e-01 : f32
    %54 = vector.broadcast %cst_24 : f32 to vector<8x128xf32>
    %55 = arith.addf %53, %54 : vector<8x128xf32>
    %56 = arith.select %13, %51, %55 : vector<8x128xi1>, vector<8x128xf32>
    %c96_i32_25 = arith.constant 96 : i32
    %57 = tpu.dynamic_rotate %56 by %c96_i32_25 dim 1 : vector<8x128xf32>, i32 -> vector<8x128xf32>
    %c64_i32_26 = arith.constant 64 : i32
    %58 = tpu.dynamic_rotate %56 by %c64_i32_26 dim 1 : vector<8x128xf32>, i32 -> vector<8x128xf32>
    %c32_i32_27 = arith.constant 32 : i32
    %59 = tpu.dynamic_rotate %56 by %c32_i32_27 dim 1 : vector<8x128xf32>, i32 -> vector<8x128xf32>
    %60 = arith.mulf %57, %36 : vector<8x128xf32>
    %61 = arith.mulf %56, %58 : vector<8x128xf32>
    %62 = arith.addf %60, %61 : vector<8x128xf32>
    %63 = math.tanh %62 : vector<8x128xf32>
    %64 = arith.mulf %59, %63 : vector<8x128xf32>
    %65 = arith.index_cast %43 : i32 to index
    %c0_28 = arith.constant 0 : index
    %66 = vector.load %arg8[%65, %c0_28] : memref<64x128xf32, #tpu.memory_space<vmem>>, vector<8x128xf32>
    tpu.vector_store %arg8[%65, %c0_28], %64 {strides = array<i32>} : memref<64x128xf32, #tpu.memory_space<vmem>>, vector<8x128xf32>,
    %67 = arith.truncf %64 : vector<8x128xf32> to vector<8x128xbf16>
    %c2_i32 = arith.constant 2 : i32
    %c8_i32_29 = arith.constant 8 : i32
    %68 = arith.muli %c2_i32, %c8_i32_29 : i32
    %69 = tpu.assume_multiple %68, 8 : i32
    %70 = arith.index_cast %69 : i32 to index
    %c0_30 = arith.constant 0 : index
    %71 = vector.load %arg7[%70, %c0_30] : memref<64x128xf32, #tpu.memory_space<vmem>>, vector<8x128xf32>
    %cst_31 = arith.constant dense<0.000000e+00> : vector<8x128xf32>
    %72 = tpu.matmul %67, %7, %cst_31 {dimension_numbers = #tpu.dot_dimension_numbers<[1], [0], [0], [1], [0, 0, 1, 1], [], []>} : vector<8x128xbf16>, vector<128x128xbf16>, vector<8x128xf32> -> vector<8x128xf32>
    %73 = arith.addf %71, %72 : vector<8x128xf32>
    %cst_32 = arith.constant 5.000000e-01 : f32
    %74 = vector.broadcast %cst_32 : f32 to vector<8x128xf32>
    %75 = arith.mulf %74, %73 : vector<8x128xf32>
    %76 = arith.select %13, %73, %75 : vector<8x128xi1>, vector<8x128xf32>
    %77 = math.tanh %76 : vector<8x128xf32>
    %cst_33 = arith.constant 5.000000e-01 : f32
    %78 = vector.broadcast %cst_33 : f32 to vector<8x128xf32>
    %79 = arith.mulf %78, %77 : vector<8x128xf32>
    %cst_34 = arith.constant 5.000000e-01 : f32
    %80 = vector.broadcast %cst_34 : f32 to vector<8x128xf32>
    %81 = arith.addf %79, %80 : vector<8x128xf32>
    %82 = arith.select %13, %77, %81 : vector<8x128xi1>, vector<8x128xf32>
    %c96_i32_35 = arith.constant 96 : i32
    %83 = tpu.dynamic_rotate %82 by %c96_i32_35 dim 1 : vector<8x128xf32>, i32 -> vector<8x128xf32>
    %c64_i32_36 = arith.constant 64 : i32
    %84 = tpu.dynamic_rotate %82 by %c64_i32_36 dim 1 : vector<8x128xf32>, i32 -> vector<8x128xf32>
    %c32_i32_37 = arith.constant 32 : i32
    %85 = tpu.dynamic_rotate %82 by %c32_i32_37 dim 1 : vector<8x128xf32>, i32 -> vector<8x128xf32>
    %86 = arith.mulf %83, %62 : vector<8x128xf32>
    %87 = arith.mulf %82, %84 : vector<8x128xf32>
    %88 = arith.addf %86, %87 : vector<8x128xf32>
    %89 = math.tanh %88 : vector<8x128xf32>
    %90 = arith.mulf %85, %89 : vector<8x128xf32>
    %91 = arith.index_cast %69 : i32 to index
    %c0_38 = arith.constant 0 : index
    %92 = vector.load %arg8[%91, %c0_38] : memref<64x128xf32, #tpu.memory_space<vmem>>, vector<8x128xf32>
    tpu.vector_store %arg8[%91, %c0_38], %90 {strides = array<i32>} : memref<64x128xf32, #tpu.memory_space<vmem>>, vector<8x128xf32>,
    %93 = arith.truncf %90 : vector<8x128xf32> to vector<8x128xbf16>
    %c3_i32 = arith.constant 3 : i32
    %c8_i32_39 = arith.constant 8 : i32
    %94 = arith.muli %c3_i32, %c8_i32_39 : i32
    %95 = tpu.assume_multiple %94, 8 : i32
    %96 = arith.index_cast %95 : i32 to index
    %c0_40 = arith.constant 0 : index
    %97 = vector.load %arg7[%96, %c0_40] : memref<64x128xf32, #tpu.memory_space<vmem>>, vector<8x128xf32>
    %cst_41 = arith.constant dense<0.000000e+00> : vector<8x128xf32>
    %98 = tpu.matmul %93, %7, %cst_41 {dimension_numbers = #tpu.dot_dimension_numbers<[1], [0], [0], [1], [0, 0, 1, 1], [], []>} : vector<8x128xbf16>, vector<128x128xbf16>, vector<8x128xf32> -> vector<8x128xf32>
    %99 = arith.addf %97, %98 : vector<8x128xf32>
    %cst_42 = arith.constant 5.000000e-01 : f32
    %100 = vector.broadcast %cst_42 : f32 to vector<8x128xf32>
    %101 = arith.mulf %100, %99 : vector<8x128xf32>
    %102 = arith.select %13, %99, %101 : vector<8x128xi1>, vector<8x128xf32>
    %103 = math.tanh %102 : vector<8x128xf32>
    %cst_43 = arith.constant 5.000000e-01 : f32
    %104 = vector.broadcast %cst_43 : f32 to vector<8x128xf32>
    %105 = arith.mulf %104, %103 : vector<8x128xf32>
    %cst_44 = arith.constant 5.000000e-01 : f32
    %106 = vector.broadcast %cst_44 : f32 to vector<8x128xf32>
    %107 = arith.addf %105, %106 : vector<8x128xf32>
    %108 = arith.select %13, %103, %107 : vector<8x128xi1>, vector<8x128xf32>
    %c96_i32_45 = arith.constant 96 : i32
    %109 = tpu.dynamic_rotate %108 by %c96_i32_45 dim 1 : vector<8x128xf32>, i32 -> vector<8x128xf32>
    %c64_i32_46 = arith.constant 64 : i32
    %110 = tpu.dynamic_rotate %108 by %c64_i32_46 dim 1 : vector<8x128xf32>, i32 -> vector<8x128xf32>
    %c32_i32_47 = arith.constant 32 : i32
    %111 = tpu.dynamic_rotate %108 by %c32_i32_47 dim 1 : vector<8x128xf32>, i32 -> vector<8x128xf32>
    %112 = arith.mulf %109, %88 : vector<8x128xf32>
    %113 = arith.mulf %108, %110 : vector<8x128xf32>
    %114 = arith.addf %112, %113 : vector<8x128xf32>
    %115 = math.tanh %114 : vector<8x128xf32>
    %116 = arith.mulf %111, %115 : vector<8x128xf32>
    %117 = arith.index_cast %95 : i32 to index
    %c0_48 = arith.constant 0 : index
    %118 = vector.load %arg8[%117, %c0_48] : memref<64x128xf32, #tpu.memory_space<vmem>>, vector<8x128xf32>
    tpu.vector_store %arg8[%117, %c0_48], %116 {strides = array<i32>} : memref<64x128xf32, #tpu.memory_space<vmem>>, vector<8x128xf32>,
    %119 = arith.truncf %116 : vector<8x128xf32> to vector<8x128xbf16>
    %c4_i32 = arith.constant 4 : i32
    %c8_i32_49 = arith.constant 8 : i32
    %120 = arith.muli %c4_i32, %c8_i32_49 : i32
    %121 = tpu.assume_multiple %120, 8 : i32
    %122 = arith.index_cast %121 : i32 to index
    %c0_50 = arith.constant 0 : index
    %123 = vector.load %arg7[%122, %c0_50] : memref<64x128xf32, #tpu.memory_space<vmem>>, vector<8x128xf32>
    %cst_51 = arith.constant dense<0.000000e+00> : vector<8x128xf32>
    %124 = tpu.matmul %119, %7, %cst_51 {dimension_numbers = #tpu.dot_dimension_numbers<[1], [0], [0], [1], [0, 0, 1, 1], [], []>} : vector<8x128xbf16>, vector<128x128xbf16>, vector<8x128xf32> -> vector<8x128xf32>
    %125 = arith.addf %123, %124 : vector<8x128xf32>
    %cst_52 = arith.constant 5.000000e-01 : f32
    %126 = vector.broadcast %cst_52 : f32 to vector<8x128xf32>
    %127 = arith.mulf %126, %125 : vector<8x128xf32>
    %128 = arith.select %13, %125, %127 : vector<8x128xi1>, vector<8x128xf32>
    %129 = math.tanh %128 : vector<8x128xf32>
    %cst_53 = arith.constant 5.000000e-01 : f32
    %130 = vector.broadcast %cst_53 : f32 to vector<8x128xf32>
    %131 = arith.mulf %130, %129 : vector<8x128xf32>
    %cst_54 = arith.constant 5.000000e-01 : f32
    %132 = vector.broadcast %cst_54 : f32 to vector<8x128xf32>
    %133 = arith.addf %131, %132 : vector<8x128xf32>
    %134 = arith.select %13, %129, %133 : vector<8x128xi1>, vector<8x128xf32>
    %c96_i32_55 = arith.constant 96 : i32
    %135 = tpu.dynamic_rotate %134 by %c96_i32_55 dim 1 : vector<8x128xf32>, i32 -> vector<8x128xf32>
    %c64_i32_56 = arith.constant 64 : i32
    %136 = tpu.dynamic_rotate %134 by %c64_i32_56 dim 1 : vector<8x128xf32>, i32 -> vector<8x128xf32>
    %c32_i32_57 = arith.constant 32 : i32
    %137 = tpu.dynamic_rotate %134 by %c32_i32_57 dim 1 : vector<8x128xf32>, i32 -> vector<8x128xf32>
    %138 = arith.mulf %135, %114 : vector<8x128xf32>
    %139 = arith.mulf %134, %136 : vector<8x128xf32>
    %140 = arith.addf %138, %139 : vector<8x128xf32>
    %141 = math.tanh %140 : vector<8x128xf32>
    %142 = arith.mulf %137, %141 : vector<8x128xf32>
    %143 = arith.index_cast %121 : i32 to index
    %c0_58 = arith.constant 0 : index
    %144 = vector.load %arg8[%143, %c0_58] : memref<64x128xf32, #tpu.memory_space<vmem>>, vector<8x128xf32>
    tpu.vector_store %arg8[%143, %c0_58], %142 {strides = array<i32>} : memref<64x128xf32, #tpu.memory_space<vmem>>, vector<8x128xf32>,
    %145 = arith.truncf %142 : vector<8x128xf32> to vector<8x128xbf16>
    %c5_i32 = arith.constant 5 : i32
    %c8_i32_59 = arith.constant 8 : i32
    %146 = arith.muli %c5_i32, %c8_i32_59 : i32
    %147 = tpu.assume_multiple %146, 8 : i32
    %148 = arith.index_cast %147 : i32 to index
    %c0_60 = arith.constant 0 : index
    %149 = vector.load %arg7[%148, %c0_60] : memref<64x128xf32, #tpu.memory_space<vmem>>, vector<8x128xf32>
    %cst_61 = arith.constant dense<0.000000e+00> : vector<8x128xf32>
    %150 = tpu.matmul %145, %7, %cst_61 {dimension_numbers = #tpu.dot_dimension_numbers<[1], [0], [0], [1], [0, 0, 1, 1], [], []>} : vector<8x128xbf16>, vector<128x128xbf16>, vector<8x128xf32> -> vector<8x128xf32>
    %151 = arith.addf %149, %150 : vector<8x128xf32>
    %cst_62 = arith.constant 5.000000e-01 : f32
    %152 = vector.broadcast %cst_62 : f32 to vector<8x128xf32>
    %153 = arith.mulf %152, %151 : vector<8x128xf32>
    %154 = arith.select %13, %151, %153 : vector<8x128xi1>, vector<8x128xf32>
    %155 = math.tanh %154 : vector<8x128xf32>
    %cst_63 = arith.constant 5.000000e-01 : f32
    %156 = vector.broadcast %cst_63 : f32 to vector<8x128xf32>
    %157 = arith.mulf %156, %155 : vector<8x128xf32>
    %cst_64 = arith.constant 5.000000e-01 : f32
    %158 = vector.broadcast %cst_64 : f32 to vector<8x128xf32>
    %159 = arith.addf %157, %158 : vector<8x128xf32>
    %160 = arith.select %13, %155, %159 : vector<8x128xi1>, vector<8x128xf32>
    %c96_i32_65 = arith.constant 96 : i32
    %161 = tpu.dynamic_rotate %160 by %c96_i32_65 dim 1 : vector<8x128xf32>, i32 -> vector<8x128xf32>
    %c64_i32_66 = arith.constant 64 : i32
    %162 = tpu.dynamic_rotate %160 by %c64_i32_66 dim 1 : vector<8x128xf32>, i32 -> vector<8x128xf32>
    %c32_i32_67 = arith.constant 32 : i32
    %163 = tpu.dynamic_rotate %160 by %c32_i32_67 dim 1 : vector<8x128xf32>, i32 -> vector<8x128xf32>
    %164 = arith.mulf %161, %140 : vector<8x128xf32>
    %165 = arith.mulf %160, %162 : vector<8x128xf32>
    %166 = arith.addf %164, %165 : vector<8x128xf32>
    %167 = math.tanh %166 : vector<8x128xf32>
    %168 = arith.mulf %163, %167 : vector<8x128xf32>
    %169 = arith.index_cast %147 : i32 to index
    %c0_68 = arith.constant 0 : index
    %170 = vector.load %arg8[%169, %c0_68] : memref<64x128xf32, #tpu.memory_space<vmem>>, vector<8x128xf32>
    tpu.vector_store %arg8[%169, %c0_68], %168 {strides = array<i32>} : memref<64x128xf32, #tpu.memory_space<vmem>>, vector<8x128xf32>,
    %171 = arith.truncf %168 : vector<8x128xf32> to vector<8x128xbf16>
    %c6_i32 = arith.constant 6 : i32
    %c8_i32_69 = arith.constant 8 : i32
    %172 = arith.muli %c6_i32, %c8_i32_69 : i32
    %173 = tpu.assume_multiple %172, 8 : i32
    %174 = arith.index_cast %173 : i32 to index
    %c0_70 = arith.constant 0 : index
    %175 = vector.load %arg7[%174, %c0_70] : memref<64x128xf32, #tpu.memory_space<vmem>>, vector<8x128xf32>
    %cst_71 = arith.constant dense<0.000000e+00> : vector<8x128xf32>
    %176 = tpu.matmul %171, %7, %cst_71 {dimension_numbers = #tpu.dot_dimension_numbers<[1], [0], [0], [1], [0, 0, 1, 1], [], []>} : vector<8x128xbf16>, vector<128x128xbf16>, vector<8x128xf32> -> vector<8x128xf32>
    %177 = arith.addf %175, %176 : vector<8x128xf32>
    %cst_72 = arith.constant 5.000000e-01 : f32
    %178 = vector.broadcast %cst_72 : f32 to vector<8x128xf32>
    %179 = arith.mulf %178, %177 : vector<8x128xf32>
    %180 = arith.select %13, %177, %179 : vector<8x128xi1>, vector<8x128xf32>
    %181 = math.tanh %180 : vector<8x128xf32>
    %cst_73 = arith.constant 5.000000e-01 : f32
    %182 = vector.broadcast %cst_73 : f32 to vector<8x128xf32>
    %183 = arith.mulf %182, %181 : vector<8x128xf32>
    %cst_74 = arith.constant 5.000000e-01 : f32
    %184 = vector.broadcast %cst_74 : f32 to vector<8x128xf32>
    %185 = arith.addf %183, %184 : vector<8x128xf32>
    %186 = arith.select %13, %181, %185 : vector<8x128xi1>, vector<8x128xf32>
    %c96_i32_75 = arith.constant 96 : i32
    %187 = tpu.dynamic_rotate %186 by %c96_i32_75 dim 1 : vector<8x128xf32>, i32 -> vector<8x128xf32>
    %c64_i32_76 = arith.constant 64 : i32
    %188 = tpu.dynamic_rotate %186 by %c64_i32_76 dim 1 : vector<8x128xf32>, i32 -> vector<8x128xf32>
    %c32_i32_77 = arith.constant 32 : i32
    %189 = tpu.dynamic_rotate %186 by %c32_i32_77 dim 1 : vector<8x128xf32>, i32 -> vector<8x128xf32>
    %190 = arith.mulf %187, %166 : vector<8x128xf32>
    %191 = arith.mulf %186, %188 : vector<8x128xf32>
    %192 = arith.addf %190, %191 : vector<8x128xf32>
    %193 = math.tanh %192 : vector<8x128xf32>
    %194 = arith.mulf %189, %193 : vector<8x128xf32>
    %195 = arith.index_cast %173 : i32 to index
    %c0_78 = arith.constant 0 : index
    %196 = vector.load %arg8[%195, %c0_78] : memref<64x128xf32, #tpu.memory_space<vmem>>, vector<8x128xf32>
    tpu.vector_store %arg8[%195, %c0_78], %194 {strides = array<i32>} : memref<64x128xf32, #tpu.memory_space<vmem>>, vector<8x128xf32>,
    %197 = arith.truncf %194 : vector<8x128xf32> to vector<8x128xbf16>
    %c7_i32 = arith.constant 7 : i32
    %c8_i32_79 = arith.constant 8 : i32
    %198 = arith.muli %c7_i32, %c8_i32_79 : i32
    %199 = tpu.assume_multiple %198, 8 : i32
    %200 = arith.index_cast %199 : i32 to index
    %c0_80 = arith.constant 0 : index
    %201 = vector.load %arg7[%200, %c0_80] : memref<64x128xf32, #tpu.memory_space<vmem>>, vector<8x128xf32>
    %cst_81 = arith.constant dense<0.000000e+00> : vector<8x128xf32>
    %202 = tpu.matmul %197, %7, %cst_81 {dimension_numbers = #tpu.dot_dimension_numbers<[1], [0], [0], [1], [0, 0, 1, 1], [], []>} : vector<8x128xbf16>, vector<128x128xbf16>, vector<8x128xf32> -> vector<8x128xf32>
    %203 = arith.addf %201, %202 : vector<8x128xf32>
    %cst_82 = arith.constant 5.000000e-01 : f32
    %204 = vector.broadcast %cst_82 : f32 to vector<8x128xf32>
    %205 = arith.mulf %204, %203 : vector<8x128xf32>
    %206 = arith.select %13, %203, %205 : vector<8x128xi1>, vector<8x128xf32>
    %207 = math.tanh %206 : vector<8x128xf32>
    %cst_83 = arith.constant 5.000000e-01 : f32
    %208 = vector.broadcast %cst_83 : f32 to vector<8x128xf32>
    %209 = arith.mulf %208, %207 : vector<8x128xf32>
    %cst_84 = arith.constant 5.000000e-01 : f32
    %210 = vector.broadcast %cst_84 : f32 to vector<8x128xf32>
    %211 = arith.addf %209, %210 : vector<8x128xf32>
    %212 = arith.select %13, %207, %211 : vector<8x128xi1>, vector<8x128xf32>
    %c96_i32_85 = arith.constant 96 : i32
    %213 = tpu.dynamic_rotate %212 by %c96_i32_85 dim 1 : vector<8x128xf32>, i32 -> vector<8x128xf32>
    %c64_i32_86 = arith.constant 64 : i32
    %214 = tpu.dynamic_rotate %212 by %c64_i32_86 dim 1 : vector<8x128xf32>, i32 -> vector<8x128xf32>
    %c32_i32_87 = arith.constant 32 : i32
    %215 = tpu.dynamic_rotate %212 by %c32_i32_87 dim 1 : vector<8x128xf32>, i32 -> vector<8x128xf32>
    %216 = arith.mulf %213, %192 : vector<8x128xf32>
    %217 = arith.mulf %212, %214 : vector<8x128xf32>
    %218 = arith.addf %216, %217 : vector<8x128xf32>
    %219 = math.tanh %218 : vector<8x128xf32>
    %220 = arith.mulf %215, %219 : vector<8x128xf32>
    %221 = arith.index_cast %199 : i32 to index
    %c0_88 = arith.constant 0 : index
    %222 = vector.load %arg8[%221, %c0_88] : memref<64x128xf32, #tpu.memory_space<vmem>>, vector<8x128xf32>
    tpu.vector_store %arg8[%221, %c0_88], %220 {strides = array<i32>} : memref<64x128xf32, #tpu.memory_space<vmem>>, vector<8x128xf32>,
    %223 = arith.truncf %220 : vector<8x128xf32> to vector<8x128xbf16>
    %c8_i32_89 = arith.constant 8 : i32
    %c0_90 = arith.constant 0 : index
    %c0_91 = arith.constant 0 : index
    %224 = vector.load %arg8[%c0_90, %c0_91] : memref<64x128xf32, #tpu.memory_space<vmem>>, vector<64x128xf32>
    %225 = arith.truncf %224 : vector<64x128xf32> to vector<64x128xbf16>
    %c0_92 = arith.constant 0 : index
    %c0_93 = arith.constant 0 : index
    %226 = vector.load %arg4[%c0_92, %c0_93] : memref<128x128xbf16, #tpu.memory_space<vmem>>, vector<128x128xbf16>
    %cst_94 = arith.constant dense<0.000000e+00> : vector<64x128xf32>
    %227 = tpu.matmul %225, %226, %cst_94 {dimension_numbers = #tpu.dot_dimension_numbers<[1], [0], [0], [1], [0, 0, 1, 1], [], []>} : vector<64x128xbf16>, vector<128x128xbf16>, vector<64x128xf32> -> vector<64x128xf32>
    %c0_95 = arith.constant 0 : index
    %c0_96 = arith.constant 0 : index
    %228 = vector.load %arg5[%c0_95, %c0_96] : memref<1x128xf32, #tpu.memory_space<vmem>>, vector<1x128xf32>
    %229 = vector.broadcast %228 : vector<1x128xf32> to vector<64x128xf32>
    %230 = arith.addf %227, %229 : vector<64x128xf32>
    %c0_97 = arith.constant 0 : index
    %c0_98 = arith.constant 0 : index
    %231 = vector.load %arg6[%c0_97, %c0_98] : memref<64x128xf32, #tpu.memory_space<vmem>>, vector<64x128xf32>
    tpu.vector_store %arg6[%c0_97, %c0_98], %230 {strides = array<i32>} : memref<64x128xf32, #tpu.memory_space<vmem>>, vector<64x128xf32>,
    return
  }
}

</mosaic_0001>

<llo_original>
// kernel: blitz_lstm_forward.1
$region0: #{blitz_lstm_forward.1}
  #allocation0 [shape = 'u32[]', space=smem, size = 0x4, offset = 0x4, fixed_abs, tag = 'smem constant byte address 0x4 - core index']
  #allocation1 [shape = 'u32[144,128]{1,0:T(1,128)}', space=vmem, size = 0x12000, scoped, tag = 'internal scratch']
  #allocation2 [shape = 'f32[64,128]{1,0:T(8,128)}', space=vmem, size = 0x8000, scoped, tag = 'scratch operand']
  #allocation3 [shape = 'f32[64,128]{1,0:T(8,128)}', space=vmem, size = 0x8000, scoped, tag = 'scratch operand']
  %s0 = inlined_call_operand.vmem [shape: bf16[64,207], index: 0, kind: input, shape index: {}]
  %s1 = inlined_call_operand.vmem [shape: bf16[207,128], index: 1, kind: input, shape index: {}]
  %s2 = inlined_call_operand.vmem [shape: bf16[128,128], index: 2, kind: input, shape index: {}]
  %s3 = inlined_call_operand.vmem [shape: f32[1,128], index: 3, kind: input, shape index: {}]
  %s4 = inlined_call_operand.vmem [shape: bf16[128,128], index: 4, kind: input, shape index: {}]
  %s5 = inlined_call_operand.vmem [shape: f32[1,128], index: 5, kind: input, shape index: {}]
  %s6 = inlined_call_operand.vmem [shape: f32[64,128], index: 6, kind: output, shape index: {}]
  %s7 = sld [smem:[#allocation0]]
  $region34: #{blitz_lstm_forward.1} parent=0
    _
  %s9 = ssub.s32 1, %s7
  %s10 = scalar_select 0, %s9, %s7
  // Predicated region
  $region2: #{blitz_lstm_forward.1} parent=0 // pred_check
    _
  $region3: #{blitz_lstm_forward.1} parent=0 // pred_check_branch
    %12 = sbr.rel (0) target = $region5
  $region4: #{blitz_lstm_forward.1} parent=0 // pred_region
    _
  $region5: #{blitz_lstm_forward.1} parent=0 // pred_fallthru
    _
  // Predicated region
  $region6: #{blitz_lstm_forward.1} parent=0 // pred_check
    _
  $region7: #{blitz_lstm_forward.1} parent=0 // pred_check_branch
    %14 = sbr.rel (0) target = $region9
  $region8: #{blitz_lstm_forward.1} parent=0 // pred_region
    _
  $region9: #{blitz_lstm_forward.1} parent=0 // pred_fallthru
    _
  // Predicated region
  $region10: #{blitz_lstm_forward.1} parent=0 // pred_check
    _
  $region11: #{blitz_lstm_forward.1} parent=0 // pred_check_branch
    %16 = sbr.rel (0) target = $region13
  $region12: #{blitz_lstm_forward.1} parent=0 // pred_region
    _
  $region13: #{blitz_lstm_forward.1} parent=0 // pred_fallthru
    _
  // Predicated region
  $region14: #{blitz_lstm_forward.1} parent=0 // pred_check
    _
  $region15: #{blitz_lstm_forward.1} parent=0 // pred_check_branch
    %18 = sbr.rel (0) target = $region17
  $region16: #{blitz_lstm_forward.1} parent=0 // pred_region
    _
  $region17: #{blitz_lstm_forward.1} parent=0 // pred_fallthru
    _
  // Predicated region
  $region18: #{blitz_lstm_forward.1} parent=0 // pred_check
    _
  $region19: #{blitz_lstm_forward.1} parent=0 // pred_check_branch
    %20 = sbr.rel (0) target = $region21
  $region20: #{blitz_lstm_forward.1} parent=0 // pred_region
    _
  $region21: #{blitz_lstm_forward.1} parent=0 // pred_fallthru
    _
  // Predicated region
  $region22: #{blitz_lstm_forward.1} parent=0 // pred_check
    _
  $region23: #{blitz_lstm_forward.1} parent=0 // pred_check_branch
    %22 = sbr.rel (0) target = $region25
  $region24: #{blitz_lstm_forward.1} parent=0 // pred_region
    _
  $region25: #{blitz_lstm_forward.1} parent=0 // pred_fallthru
    _
  %v24 = vld [vmem:[%s0] sm:$0xff]
  %v25 = vld [vmem:[%s0 + $0x8] sm:$0xff]
  %v26 = vld [vmem:[%s0 + $0x10] sm:$0xff]
  %v27 = vld [vmem:[%s0 + $0x18] sm:$0xff]
  %v28 = vld [vmem:[%s0 + $0x20] sm:$0xff]
  %v29 = vld [vmem:[%s0 + $0x28] sm:$0xff]
  %v30 = vld [vmem:[%s0 + $0x30] sm:$0xff]
  %v31 = vld [vmem:[%s0 + $0x38] sm:$0xff]
  %v32 = vld [vmem:[%s1] sm:$0xf]
  %v33 = vld [vmem:[%s1 + $0x4] sm:$0xf]
  %v34 = vld [vmem:[%s1 + $0x8] sm:$0xf]
  %v35 = vld [vmem:[%s1 + $0xc] sm:$0xf]
  %v36 = vld [vmem:[%s1 + $0x10] sm:$0xf]
  %v37 = vld [vmem:[%s1 + $0x14] sm:$0xf]
  %v38 = vld [vmem:[%s1 + $0x18] sm:$0xf]
  %v39 = vld [vmem:[%s1 + $0x1c] sm:$0xf]
  %v40 = vld [vmem:[%s1 + $0x20] sm:$0xf]
  %v41 = vld [vmem:[%s1 + $0x24] sm:$0xf]
  %v42 = vld [vmem:[%s1 + $0x28] sm:$0xf]
  %v43 = vld [vmem:[%s1 + $0x2c] sm:$0xf]
  %v44 = vld [vmem:[%s1 + $0x30] sm:$0xf]
  %v45 = vld [vmem:[%s1 + $0x34] sm:$0xf]
  %v46 = vld [vmem:[%s1 + $0x38] sm:$0xf]
  %v47 = vld [vmem:[%s1 + $0x3c] sm:$0xf]
  %v48 = vld [vmem:[%s1 + $0x40] sm:$0xf]
  %v49 = vld [vmem:[%s1 + $0x44] sm:$0xf]
  %v50 = vld [vmem:[%s1 + $0x48] sm:$0xf]
  %v51 = vld [vmem:[%s1 + $0x4c] sm:$0xf]
  %v52 = vld [vmem:[%s1 + $0x50] sm:$0xf]
  %v53 = vld [vmem:[%s1 + $0x54] sm:$0xf]
  %v54 = vld [vmem:[%s1 + $0x58] sm:$0xf]
  %v55 = vld [vmem:[%s1 + $0x5c] sm:$0xf]
  %v56 = vld [vmem:[%s1 + $0x60] sm:$0xf]
  %v57 = vld [vmem:[%s1 + $0x64] sm:$0xf]
  %v58 = vld [vmem:[%s3] sm:$0x1]
  %v60 = vlaneseq
  %v61 = vshrl.u32 %v60, 7
  %v62 = vsub.s32 0, %v61
  %v63 = vrot.slane %v58, %v62
  %v73 = vunpack.c.l.b16 %v24
  %v74 = vunpack.c.h.b16 %v24
  %v75 = vunpack.c.l.b16 %v25
  %v76 = vunpack.c.h.b16 %v25
  %v77 = vunpack.c.l.b16 %v26
  %v78 = vunpack.c.h.b16 %v26
  %v79 = vunpack.c.l.b16 %v27
  %v80 = vunpack.c.h.b16 %v27
  %v81 = vunpack.c.l.b16 %v28
  %v82 = vunpack.c.h.b16 %v28
  %v83 = vunpack.c.l.b16 %v29
  %v84 = vunpack.c.h.b16 %v29
  %v85 = vunpack.c.l.b16 %v30
  %v86 = vunpack.c.h.b16 %v30
  %v87 = vunpack.c.l.b16 %v31
  %v88 = vunpack.c.h.b16 %v31
  %v89 = vpack.c.b16 %v75, %v73
  %v90 = vpack.c.b16 %v76, %v74
  %v91 = vpack.c.b16 %v79, %v77
  %v92 = vpack.c.b16 %v80, %v78
  %v93 = vpack.c.b16 %v83, %v81
  %v94 = vpack.c.b16 %v84, %v82
  %v95 = vpack.c.b16 %v87, %v85
  %v96 = vpack.c.b16 %v88, %v86
  %v127 = vunpack.c.l.b16 %v32
  %v128 = vunpack.c.l.b16 %v33
  %v129 = vunpack.c.l.b16 %v34
  %v130 = vunpack.c.l.b16 %v35
  %v131 = vunpack.c.l.b16 %v36
  %v132 = vunpack.c.l.b16 %v37
  %v133 = vunpack.c.l.b16 %v38
  %v134 = vunpack.c.l.b16 %v39
  %v135 = vunpack.c.l.b16 %v40
  %v136 = vunpack.c.l.b16 %v41
  %v137 = vunpack.c.l.b16 %v42
  %v138 = vunpack.c.l.b16 %v43
  %v139 = vunpack.c.l.b16 %v44
  %v140 = vunpack.c.l.b16 %v45
  %v141 = vunpack.c.l.b16 %v46
  %v142 = vunpack.c.l.b16 %v47
  %v143 = vunpack.c.l.b16 %v48
  %v144 = vunpack.c.l.b16 %v49
  %v145 = vunpack.c.l.b16 %v50
  %v146 = vunpack.c.l.b16 %v51
  %v147 = vunpack.c.l.b16 %v52
  %v148 = vunpack.c.l.b16 %v53
  %v149 = vunpack.c.l.b16 %v54
  %v150 = vunpack.c.l.b16 %v55
  %v151 = vunpack.c.l.b16 %v56
  %v152 = vunpack.c.l.b16 %v57
  %v153 = vpack.c.b16 %v128, %v127
  %v154 = vpack.c.b16 %v130, %v129
  %v155 = vpack.c.b16 %v132, %v131
  %v156 = vpack.c.b16 %v134, %v133
  %v157 = vpack.c.b16 %v136, %v135
  %v158 = vpack.c.b16 %v138, %v137
  %v159 = vpack.c.b16 %v140, %v139
  %v160 = vpack.c.b16 %v142, %v141
  %v161 = vpack.c.b16 %v144, %v143
  %v162 = vpack.c.b16 %v146, %v145
  %v163 = vpack.c.b16 %v148, %v147
  %v164 = vpack.c.b16 %v150, %v149
  %v165 = vpack.c.b16 %v152, %v151
  %vm178 = vcmask 646144
  %v180 = vsel %vm178, %v90, 0
  %v183 = vsel %vm178, %v92, 0
  %v186 = vsel %vm178, %v94, 0
  %v189 = vsel %vm178, %v96, 0
  %vm191 = vcmask 1046528
  %vm192 = vcmask 1047552
  %v193 = vsel %vm191, 4294967295, 65535
  %v194 = vsel %vm192, %v193, 0
  %v196 = vand.u32 %v165, %v194
  %198 = vmatprep.subr.bf16.mxu0 0
  %199 = vmatpush1.bf16.msra.mxu0 %v153
  %200 = vmatprep.subr.bf16.mxu0 0
  %201 = vmatpush1.bf16.msra.mxu0 %v154
  %202 = vmatprep.subr.bf16.mxu0 0
  %203 = vmatpush1.bf16.msra.mxu0 %v155
  %204 = vmatprep.subr.bf16.mxu0 0
  %205 = vmatpush1.bf16.msra.mxu0 %v156
  %206 = vmatprep.subr.bf16.mxu0 0
  %207 = vmatpush1.bf16.msra.mxu0 %v157
  %208 = vmatprep.subr.bf16.mxu0 0
  %209 = vmatpush1.bf16.msra.mxu0 %v158
  %210 = vmatprep.subr.bf16.mxu0 0
  %211 = vmatpush1.bf16.msra.mxu0 %v159
  %212 = vmatprep.subr.bf16.mxu0 0
  %213 = vmatpush1.bf16.msra.mxu0 %v160
  %214 = vmatprep.subr.bf16.mxu0 0
  %215 = vmatpush1.bf16.msra.mxu0 %v161
  %216 = vmatprep.subr.bf16.mxu0 0
  %217 = vmatpush1.bf16.msra.mxu0 %v162
  %218 = vmatprep.subr.bf16.mxu0 0
  %219 = vmatpush1.bf16.msra.mxu0 %v163
  %220 = vmatprep.subr.bf16.mxu0 0
  %221 = vmatpush1.bf16.msra.mxu0 %v164
  %222 = vmatprep.subr.bf16.mxu0 0
  %223 = vmatpush1.bf16.msra.mxu0 %v196
  %224 = vmatprep.subr.bf16.mxu0 0
  %225 = vmatpush1.bf16.msra.mxu0 0
  %226 = vmatprep.subr.bf16.mxu0 0
  %227 = vmatpush1.bf16.msra.mxu0 0
  %228 = vmatprep.subr.bf16.mxu0 0
  %229 = vmatpush1.bf16.msra.mxu0 0
  %230 = vmatprep.mubr.bf16.mxu0 %v180
  %231 = vmatmul.mubr.bf16.gmra.mrb[0].mxu0 %v89
  %v232 = vpop.f32.mrb[0].mxu0
  %v233 = vadd.f32 %v63, %v232
  %v234 = vpop.f32.mrb[0].mxu0
  %v235 = vpop.f32.mrb[0].mxu0
  %v236 = vadd.f32 %v63, %v235
  %v237 = vpop.f32.mrb[0].mxu0
  %238 = vmatprep.mubr.bf16.mxu0 %v183
  %239 = vmatmul.mubr.bf16.gmra.mrb[0].mxu0 %v91
  %v240 = vpop.f32.mrb[0].mxu0
  %v241 = vadd.f32 %v63, %v240
  %v242 = vpop.f32.mrb[0].mxu0
  %v243 = vpop.f32.mrb[0].mxu0
  %v244 = vadd.f32 %v63, %v243
  %v245 = vpop.f32.mrb[0].mxu0
  %246 = vmatprep.mubr.bf16.mxu0 %v186
  %247 = vmatmul.mubr.bf16.gmra.mrb[0].mxu0 %v93
  %v248 = vpop.f32.mrb[0].mxu0
  %v249 = vadd.f32 %v63, %v248
  %v250 = vpop.f32.mrb[0].mxu0
  %v251 = vpop.f32.mrb[0].mxu0
  %v252 = vadd.f32 %v63, %v251
  %v253 = vpop.f32.mrb[0].mxu0
  %254 = vmatprep.mubr.bf16.mxu0 %v189
  %255 = vmatmul.mubr.bf16.gmra.mrb[0].mxu0 %v95
  %v256 = vpop.f32.mrb[0].mxu0
  %v257 = vadd.f32 %v63, %v256
  %v258 = vpop.f32.mrb[0].mxu0
  %v259 = vpop.f32.mrb[0].mxu0
  %v260 = vadd.f32 %v63, %v259
  %v261 = vpop.f32.mrb[0].mxu0
  %262 = vdwg.mxu0
  %263 = vst [vmem:[#allocation2] sm:$0xff] %v233
  %264 = vst [vmem:[#allocation2 + $0x8] sm:$0xff] %v236
  %265 = vst [vmem:[#allocation2 + $0x10] sm:$0xff] %v241
  %266 = vst [vmem:[#allocation2 + $0x18] sm:$0xff] %v244
  %267 = vst [vmem:[#allocation2 + $0x20] sm:$0xff] %v249
  %268 = vst [vmem:[#allocation2 + $0x28] sm:$0xff] %v252
  %269 = vst [vmem:[#allocation2 + $0x30] sm:$0xff] %v257
  %270 = vst [vmem:[#allocation2 + $0x38] sm:$0xff] %v260
  %v271 = vld [vmem:[%s2] sm:$0xf]
  %v272 = vld [vmem:[%s2 + $0x4] sm:$0xf]
  %v273 = vld [vmem:[%s2 + $0x8] sm:$0xf]
  %v274 = vld [vmem:[%s2 + $0xc] sm:$0xf]
  %v275 = vld [vmem:[%s2 + $0x10] sm:$0xf]
  %v276 = vld [vmem:[%s2 + $0x14] sm:$0xf]
  %v277 = vld [vmem:[%s2 + $0x18] sm:$0xf]
  %v278 = vld [vmem:[%s2 + $0x1c] sm:$0xf]
  %v279 = vld [vmem:[%s2 + $0x20] sm:$0xf]
  %v280 = vld [vmem:[%s2 + $0x24] sm:$0xf]
  %v281 = vld [vmem:[%s2 + $0x28] sm:$0xf]
  %v282 = vld [vmem:[%s2 + $0x2c] sm:$0xf]
  %v283 = vld [vmem:[%s2 + $0x30] sm:$0xf]
  %v284 = vld [vmem:[%s2 + $0x34] sm:$0xf]
  %v285 = vld [vmem:[%s2 + $0x38] sm:$0xf]
  %v286 = vld [vmem:[%s2 + $0x3c] sm:$0xf]
  %v287 = vlaneseq
  %v288 = vand.u32 %v287, 127
  %vm289 = vcmp.ge.s32.totalorder %v288, 64
  %vm290 = vcmp.lt.s32.totalorder %v288, 96
  %vm291 = vmand %vm289, %vm290
  %v292 = vld [vmem:[#allocation2] sm:$0xff]
  %v309 = vunpack.c.l.b16 %v271
  %v310 = vunpack.c.l.b16 %v272
  %v311 = vunpack.c.l.b16 %v273
  %v312 = vunpack.c.l.b16 %v274
  %v313 = vunpack.c.l.b16 %v275
  %v314 = vunpack.c.l.b16 %v276
  %v315 = vunpack.c.l.b16 %v277
  %v316 = vunpack.c.l.b16 %v278
  %v317 = vunpack.c.l.b16 %v279
  %v318 = vunpack.c.l.b16 %v280
  %v319 = vunpack.c.l.b16 %v281
  %v320 = vunpack.c.l.b16 %v282
  %v321 = vunpack.c.l.b16 %v283
  %v322 = vunpack.c.l.b16 %v284
  %v323 = vunpack.c.l.b16 %v285
  %v324 = vunpack.c.l.b16 %v286
  %v325 = vpack.c.b16 %v310, %v309
  %v326 = vpack.c.b16 %v312, %v311
  %v327 = vpack.c.b16 %v314, %v313
  %v328 = vpack.c.b16 %v316, %v315
  %v329 = vpack.c.b16 %v318, %v317
  %v330 = vpack.c.b16 %v320, %v319
  %v331 = vpack.c.b16 %v322, %v321
  %v332 = vpack.c.b16 %v324, %v323
  %341 = vmatprep.subr.bf16.mxu0 0
  %342 = vmatpush1.bf16.msra.mxu0 %v325
  %343 = vmatprep.subr.bf16.mxu0 0
  %344 = vmatpush1.bf16.msra.mxu0 %v326
  %345 = vmatprep.subr.bf16.mxu0 0
  %346 = vmatpush1.bf16.msra.mxu0 %v327
  %347 = vmatprep.subr.bf16.mxu0 0
  %348 = vmatpush1.bf16.msra.mxu0 %v328
  %349 = vmatprep.subr.bf16.mxu0 0
  %350 = vmatpush1.bf16.msra.mxu0 %v329
  %351 = vmatprep.subr.bf16.mxu0 0
  %352 = vmatpush1.bf16.msra.mxu0 %v330
  %353 = vmatprep.subr.bf16.mxu0 0
  %354 = vmatpush1.bf16.msra.mxu0 %v331
  %355 = vmatprep.subr.bf16.mxu0 0
  %356 = vmatpush1.bf16.msra.mxu0 %v332
  %357 = vmatprep.subr.bf16.mxu0 0
  %358 = vmatpush1.bf16.msra.mxu0 0
  %359 = vmatprep.subr.bf16.mxu0 0
  %360 = vmatpush1.bf16.msra.mxu0 0
  %361 = vmatprep.subr.bf16.mxu0 0
  %362 = vmatpush1.bf16.msra.mxu0 0
  %363 = vmatprep.subr.bf16.mxu0 0
  %364 = vmatpush1.bf16.msra.mxu0 0
  %365 = vmatprep.subr.bf16.mxu0 0
  %366 = vmatpush1.bf16.msra.mxu0 0
  %367 = vmatprep.subr.bf16.mxu0 0
  %368 = vmatpush1.bf16.msra.mxu0 0
  %369 = vmatprep.subr.bf16.mxu0 0
  %370 = vmatpush1.bf16.msra.mxu0 0
  %371 = vmatprep.subr.bf16.mxu0 0
  %372 = vmatpush1.bf16.msra.mxu0 0
  %373 = vmatprep.mubr.bf16.mxu0 0
  %374 = vmatmul.mubr.bf16.gmra.mrb[0].mxu0 0
  %v375 = vpop.f32.mrb[0].mxu0
  %v376 = vadd.f32 0.0, %v375
  %v377 = vpop.f32.mrb[0].mxu0
  %v378 = vpop.f32.mrb[0].mxu0
  %v379 = vpop.f32.mrb[0].mxu0
  %380 = vdwg.mxu0
  %v381 = vadd.f32 %v292, %v376
  %v382 = vmul.f32 %v381, 0.5
  %v383 = vsel %vm291, %v381, %v382
  %v384 = vtanh.pop %v383
  %v385 = vmul.f32 %v384, 0.5
  %v386 = vadd.f32 %v385, 0.5
  %v387 = vsel %vm291, %v384, %v386
  %388 = vrot.lane.b32.xlu0 %v387, 96
  %v389 = vpop.permute.xlu0 %388
  %390 = vrot.lane.b32.xlu0 %v387, 64
  %v391 = vpop.permute.xlu0 %390
  %392 = vrot.lane.b32.xlu0 %v387, 32
  %v393 = vpop.permute.xlu0 %392
  %v394 = vmul.f32 %v389, 0.0
  %v395 = vmul.f32 %v387, %v391
  %v396 = vadd.f32 %v394, %v395
  %v397 = vtanh.pop %v396
  %v398 = vmul.f32 %v393, %v397
  %399 = vst [vmem:[#allocation3] sm:$0xff] %v398
  %v400 = vpack.c.bf16 %v398, %v398
  %s401 = scalar_lea.vmem [#allocation2], 8
  %v402 = vld [vmem:[%s401] sm:$0xff]
  %403 = vmatprep.subr.bf16.mxu0 0
  %404 = vmatpush1.bf16.msra.mxu0 %v325
  %405 = vmatprep.subr.bf16.mxu0 0
  %406 = vmatpush1.bf16.msra.mxu0 %v326
  %407 = vmatprep.subr.bf16.mxu0 0
  %408 = vmatpush1.bf16.msra.mxu0 %v327
  %409 = vmatprep.subr.bf16.mxu0 0
  %410 = vmatpush1.bf16.msra.mxu0 %v328
  %411 = vmatprep.subr.bf16.mxu0 0
  %412 = vmatpush1.bf16.msra.mxu0 %v329
  %413 = vmatprep.subr.bf16.mxu0 0
  %414 = vmatpush1.bf16.msra.mxu0 %v330
  %415 = vmatprep.subr.bf16.mxu0 0
  %416 = vmatpush1.bf16.msra.mxu0 %v331
  %417 = vmatprep.subr.bf16.mxu0 0
  %418 = vmatpush1.bf16.msra.mxu0 %v332
  %419 = vmatprep.subr.bf16.mxu0 0
  %420 = vmatpush1.bf16.msra.mxu0 0
  %421 = vmatprep.subr.bf16.mxu0 0
  %422 = vmatpush1.bf16.msra.mxu0 0
  %423 = vmatprep.subr.bf16.mxu0 0
  %424 = vmatpush1.bf16.msra.mxu0 0
  %425 = vmatprep.subr.bf16.mxu0 0
  %426 = vmatpush1.bf16.msra.mxu0 0
  %427 = vmatprep.subr.bf16.mxu0 0
  %428 = vmatpush1.bf16.msra.mxu0 0
  %429 = vmatprep.subr.bf16.mxu0 0
  %430 = vmatpush1.bf16.msra.mxu0 0
  %431 = vmatprep.subr.bf16.mxu0 0
  %432 = vmatpush1.bf16.msra.mxu0 0
  %433 = vmatprep.subr.bf16.mxu0 0
  %434 = vmatpush1.bf16.msra.mxu0 0
  %435 = vmatprep.mubr.bf16.mxu0 0
  %436 = vmatmul.mubr.bf16.gmra.mrb[0].mxu0 %v400
  %v437 = vpop.f32.mrb[0].mxu0
  %v438 = vadd.f32 0.0, %v437
  %v439 = vpop.f32.mrb[0].mxu0
  %v440 = vpop.f32.mrb[0].mxu0
  %v441 = vpop.f32.mrb[0].mxu0
  %442 = vdwg.mxu0
  %v443 = vadd.f32 %v402, %v438
  %v444 = vmul.f32 %v443, 0.5
  %v445 = vsel %vm291, %v443, %v444
  %v446 = vtanh.pop %v445
  %v447 = vmul.f32 %v446, 0.5
  %v448 = vadd.f32 %v447, 0.5
  %v449 = vsel %vm291, %v446, %v448
  %450 = vrot.lane.b32.xlu0 %v449, 96
  %v451 = vpop.permute.xlu0 %450
  %452 = vrot.lane.b32.xlu0 %v449, 64
  %v453 = vpop.permute.xlu0 %452
  %454 = vrot.lane.b32.xlu0 %v449, 32
  %v455 = vpop.permute.xlu0 %454
  %v456 = vmul.f32 %v451, %v396
  %v457 = vmul.f32 %v449, %v453
  %v458 = vadd.f32 %v456, %v457
  %v459 = vtanh.pop %v458
  %v460 = vmul.f32 %v455, %v459
  %s461 = scalar_lea.vmem [#allocation3], 8
  %462 = vst [vmem:[%s461] sm:$0xff] %v460
  %v463 = vpack.c.bf16 %v460, %v460
  %s464 = scalar_lea.vmem [#allocation2], 16
  %v465 = vld [vmem:[%s464] sm:$0xff]
  %466 = vmatprep.subr.bf16.mxu0 0
  %467 = vmatpush1.bf16.msra.mxu0 %v325
  %468 = vmatprep.subr.bf16.mxu0 0
  %469 = vmatpush1.bf16.msra.mxu0 %v326
  %470 = vmatprep.subr.bf16.mxu0 0
  %471 = vmatpush1.bf16.msra.mxu0 %v327
  %472 = vmatprep.subr.bf16.mxu0 0
  %473 = vmatpush1.bf16.msra.mxu0 %v328
  %474 = vmatprep.subr.bf16.mxu0 0
  %475 = vmatpush1.bf16.msra.mxu0 %v329
  %476 = vmatprep.subr.bf16.mxu0 0
  %477 = vmatpush1.bf16.msra.mxu0 %v330
  %478 = vmatprep.subr.bf16.mxu0 0
  %479 = vmatpush1.bf16.msra.mxu0 %v331
  %480 = vmatprep.subr.bf16.mxu0 0
  %481 = vmatpush1.bf16.msra.mxu0 %v332
  %482 = vmatprep.subr.bf16.mxu0 0
  %483 = vmatpush1.bf16.msra.mxu0 0
  %484 = vmatprep.subr.bf16.mxu0 0
  %485 = vmatpush1.bf16.msra.mxu0 0
  %486 = vmatprep.subr.bf16.mxu0 0
  %487 = vmatpush1.bf16.msra.mxu0 0
  %488 = vmatprep.subr.bf16.mxu0 0
  %489 = vmatpush1.bf16.msra.mxu0 0
  %490 = vmatprep.subr.bf16.mxu0 0
  %491 = vmatpush1.bf16.msra.mxu0 0
  %492 = vmatprep.subr.bf16.mxu0 0
  %493 = vmatpush1.bf16.msra.mxu0 0
  %494 = vmatprep.subr.bf16.mxu0 0
  %495 = vmatpush1.bf16.msra.mxu0 0
  %496 = vmatprep.subr.bf16.mxu0 0
  %497 = vmatpush1.bf16.msra.mxu0 0
  %498 = vmatprep.mubr.bf16.mxu0 0
  %499 = vmatmul.mubr.bf16.gmra.mrb[0].mxu0 %v463
  %v500 = vpop.f32.mrb[0].mxu0
  %v501 = vadd.f32 0.0, %v500
  %v502 = vpop.f32.mrb[0].mxu0
  %v503 = vpop.f32.mrb[0].mxu0
  %v504 = vpop.f32.mrb[0].mxu0
  %505 = vdwg.mxu0
  %v506 = vadd.f32 %v465, %v501
  %v507 = vmul.f32 %v506, 0.5
  %v508 = vsel %vm291, %v506, %v507
  %v509 = vtanh.pop %v508
  %v510 = vmul.f32 %v509, 0.5
  %v511 = vadd.f32 %v510, 0.5
  %v512 = vsel %vm291, %v509, %v511
  %513 = vrot.lane.b32.xlu0 %v512, 96
  %v514 = vpop.permute.xlu0 %513
  %515 = vrot.lane.b32.xlu0 %v512, 64
  %v516 = vpop.permute.xlu0 %515
  %517 = vrot.lane.b32.xlu0 %v512, 32
  %v518 = vpop.permute.xlu0 %517
  %v519 = vmul.f32 %v514, %v458
  %v520 = vmul.f32 %v512, %v516
  %v521 = vadd.f32 %v519, %v520
  %v522 = vtanh.pop %v521
  %v523 = vmul.f32 %v518, %v522
  %s524 = scalar_lea.vmem [#allocation3], 16
  %525 = vst [vmem:[%s524] sm:$0xff] %v523
  %v526 = vpack.c.bf16 %v523, %v523
  %s527 = scalar_lea.vmem [#allocation2], 24
  %v528 = vld [vmem:[%s527] sm:$0xff]
  %529 = vmatprep.subr.bf16.mxu0 0
  %530 = vmatpush1.bf16.msra.mxu0 %v325
  %531 = vmatprep.subr.bf16.mxu0 0
  %532 = vmatpush1.bf16.msra.mxu0 %v326
  %533 = vmatprep.subr.bf16.mxu0 0
  %534 = vmatpush1.bf16.msra.mxu0 %v327
  %535 = vmatprep.subr.bf16.mxu0 0
  %536 = vmatpush1.bf16.msra.mxu0 %v328
  %537 = vmatprep.subr.bf16.mxu0 0
  %538 = vmatpush1.bf16.msra.mxu0 %v329
  %539 = vmatprep.subr.bf16.mxu0 0
  %540 = vmatpush1.bf16.msra.mxu0 %v330
  %541 = vmatprep.subr.bf16.mxu0 0
  %542 = vmatpush1.bf16.msra.mxu0 %v331
  %543 = vmatprep.subr.bf16.mxu0 0
  %544 = vmatpush1.bf16.msra.mxu0 %v332
  %545 = vmatprep.subr.bf16.mxu0 0
  %546 = vmatpush1.bf16.msra.mxu0 0
  %547 = vmatprep.subr.bf16.mxu0 0
  %548 = vmatpush1.bf16.msra.mxu0 0
  %549 = vmatprep.subr.bf16.mxu0 0
  %550 = vmatpush1.bf16.msra.mxu0 0
  %551 = vmatprep.subr.bf16.mxu0 0
  %552 = vmatpush1.bf16.msra.mxu0 0
  %553 = vmatprep.subr.bf16.mxu0 0
  %554 = vmatpush1.bf16.msra.mxu0 0
  %555 = vmatprep.subr.bf16.mxu0 0
  %556 = vmatpush1.bf16.msra.mxu0 0
  %557 = vmatprep.subr.bf16.mxu0 0
  %558 = vmatpush1.bf16.msra.mxu0 0
  %559 = vmatprep.subr.bf16.mxu0 0
  %560 = vmatpush1.bf16.msra.mxu0 0
  %561 = vmatprep.mubr.bf16.mxu0 0
  %562 = vmatmul.mubr.bf16.gmra.mrb[0].mxu0 %v526
  %v563 = vpop.f32.mrb[0].mxu0
  %v564 = vadd.f32 0.0, %v563
  %v565 = vpop.f32.mrb[0].mxu0
  %v566 = vpop.f32.mrb[0].mxu0
  %v567 = vpop.f32.mrb[0].mxu0
  %568 = vdwg.mxu0
  %v569 = vadd.f32 %v528, %v564
  %v570 = vmul.f32 %v569, 0.5
  %v571 = vsel %vm291, %v569, %v570
  %v572 = vtanh.pop %v571
  %v573 = vmul.f32 %v572, 0.5
  %v574 = vadd.f32 %v573, 0.5
  %v575 = vsel %vm291, %v572, %v574
  %576 = vrot.lane.b32.xlu0 %v575, 96
  %v577 = vpop.permute.xlu0 %576
  %578 = vrot.lane.b32.xlu0 %v575, 64
  %v579 = vpop.permute.xlu0 %578
  %580 = vrot.lane.b32.xlu0 %v575, 32
  %v581 = vpop.permute.xlu0 %580
  %v582 = vmul.f32 %v577, %v521
  %v583 = vmul.f32 %v575, %v579
  %v584 = vadd.f32 %v582, %v583
  %v585 = vtanh.pop %v584
  %v586 = vmul.f32 %v581, %v585
  %s587 = scalar_lea.vmem [#allocation3], 24
  %588 = vst [vmem:[%s587] sm:$0xff] %v586
  %v589 = vpack.c.bf16 %v586, %v586
  %s590 = scalar_lea.vmem [#allocation2], 32
  %v591 = vld [vmem:[%s590] sm:$0xff]
  %592 = vmatprep.subr.bf16.mxu0 0
  %593 = vmatpush1.bf16.msra.mxu0 %v325
  %594 = vmatprep.subr.bf16.mxu0 0
  %595 = vmatpush1.bf16.msra.mxu0 %v326
  %596 = vmatprep.subr.bf16.mxu0 0
  %597 = vmatpush1.bf16.msra.mxu0 %v327
  %598 = vmatprep.subr.bf16.mxu0 0
  %599 = vmatpush1.bf16.msra.mxu0 %v328
  %600 = vmatprep.subr.bf16.mxu0 0
  %601 = vmatpush1.bf16.msra.mxu0 %v329
  %602 = vmatprep.subr.bf16.mxu0 0
  %603 = vmatpush1.bf16.msra.mxu0 %v330
  %604 = vmatprep.subr.bf16.mxu0 0
  %605 = vmatpush1.bf16.msra.mxu0 %v331
  %606 = vmatprep.subr.bf16.mxu0 0
  %607 = vmatpush1.bf16.msra.mxu0 %v332
  %608 = vmatprep.subr.bf16.mxu0 0
  %609 = vmatpush1.bf16.msra.mxu0 0
  %610 = vmatprep.subr.bf16.mxu0 0
  %611 = vmatpush1.bf16.msra.mxu0 0
  %612 = vmatprep.subr.bf16.mxu0 0
  %613 = vmatpush1.bf16.msra.mxu0 0
  %614 = vmatprep.subr.bf16.mxu0 0
  %615 = vmatpush1.bf16.msra.mxu0 0
  %616 = vmatprep.subr.bf16.mxu0 0
  %617 = vmatpush1.bf16.msra.mxu0 0
  %618 = vmatprep.subr.bf16.mxu0 0
  %619 = vmatpush1.bf16.msra.mxu0 0
  %620 = vmatprep.subr.bf16.mxu0 0
  %621 = vmatpush1.bf16.msra.mxu0 0
  %622 = vmatprep.subr.bf16.mxu0 0
  %623 = vmatpush1.bf16.msra.mxu0 0
  %624 = vmatprep.mubr.bf16.mxu0 0
  %625 = vmatmul.mubr.bf16.gmra.mrb[0].mxu0 %v589
  %v626 = vpop.f32.mrb[0].mxu0
  %v627 = vadd.f32 0.0, %v626
  %v628 = vpop.f32.mrb[0].mxu0
  %v629 = vpop.f32.mrb[0].mxu0
  %v630 = vpop.f32.mrb[0].mxu0
  %631 = vdwg.mxu0
  %v632 = vadd.f32 %v591, %v627
  %v633 = vmul.f32 %v632, 0.5
  %v634 = vsel %vm291, %v632, %v633
  %v635 = vtanh.pop %v634
  %v636 = vmul.f32 %v635, 0.5
  %v637 = vadd.f32 %v636, 0.5
  %v638 = vsel %vm291, %v635, %v637
  %639 = vrot.lane.b32.xlu0 %v638, 96
  %v640 = vpop.permute.xlu0 %639
  %641 = vrot.lane.b32.xlu0 %v638, 64
  %v642 = vpop.permute.xlu0 %641
  %643 = vrot.lane.b32.xlu0 %v638, 32
  %v644 = vpop.permute.xlu0 %643
  %v645 = vmul.f32 %v640, %v584
  %v646 = vmul.f32 %v638, %v642
  %v647 = vadd.f32 %v645, %v646
  %v648 = vtanh.pop %v647
  %v649 = vmul.f32 %v644, %v648
  %s650 = scalar_lea.vmem [#allocation3], 32
  %651 = vst [vmem:[%s650] sm:$0xff] %v649
  %v652 = vpack.c.bf16 %v649, %v649
  %s653 = scalar_lea.vmem [#allocation2], 40
  %v654 = vld [vmem:[%s653] sm:$0xff]
  %655 = vmatprep.subr.bf16.mxu0 0
  %656 = vmatpush1.bf16.msra.mxu0 %v325
  %657 = vmatprep.subr.bf16.mxu0 0
  %658 = vmatpush1.bf16.msra.mxu0 %v326
  %659 = vmatprep.subr.bf16.mxu0 0
  %660 = vmatpush1.bf16.msra.mxu0 %v327
  %661 = vmatprep.subr.bf16.mxu0 0
  %662 = vmatpush1.bf16.msra.mxu0 %v328
  %663 = vmatprep.subr.bf16.mxu0 0
  %664 = vmatpush1.bf16.msra.mxu0 %v329
  %665 = vmatprep.subr.bf16.mxu0 0
  %666 = vmatpush1.bf16.msra.mxu0 %v330
  %667 = vmatprep.subr.bf16.mxu0 0
  %668 = vmatpush1.bf16.msra.mxu0 %v331
  %669 = vmatprep.subr.bf16.mxu0 0
  %670 = vmatpush1.bf16.msra.mxu0 %v332
  %671 = vmatprep.subr.bf16.mxu0 0
  %672 = vmatpush1.bf16.msra.mxu0 0
  %673 = vmatprep.subr.bf16.mxu0 0
  %674 = vmatpush1.bf16.msra.mxu0 0
  %675 = vmatprep.subr.bf16.mxu0 0
  %676 = vmatpush1.bf16.msra.mxu0 0
  %677 = vmatprep.subr.bf16.mxu0 0
  %678 = vmatpush1.bf16.msra.mxu0 0
  %679 = vmatprep.subr.bf16.mxu0 0
  %680 = vmatpush1.bf16.msra.mxu0 0
  %681 = vmatprep.subr.bf16.mxu0 0
  %682 = vmatpush1.bf16.msra.mxu0 0
  %683 = vmatprep.subr.bf16.mxu0 0
  %684 = vmatpush1.bf16.msra.mxu0 0
  %685 = vmatprep.subr.bf16.mxu0 0
  %686 = vmatpush1.bf16.msra.mxu0 0
  %687 = vmatprep.mubr.bf16.mxu0 0
  %688 = vmatmul.mubr.bf16.gmra.mrb[0].mxu0 %v652
  %v689 = vpop.f32.mrb[0].mxu0
  %v690 = vadd.f32 0.0, %v689
  %v691 = vpop.f32.mrb[0].mxu0
  %v692 = vpop.f32.mrb[0].mxu0
  %v693 = vpop.f32.mrb[0].mxu0
  %694 = vdwg.mxu0
  %v695 = vadd.f32 %v654, %v690
  %v696 = vmul.f32 %v695, 0.5
  %v697 = vsel %vm291, %v695, %v696
  %v698 = vtanh.pop %v697
  %v699 = vmul.f32 %v698, 0.5
  %v700 = vadd.f32 %v699, 0.5
  %v701 = vsel %vm291, %v698, %v700
  %702 = vrot.lane.b32.xlu0 %v701, 96
  %v703 = vpop.permute.xlu0 %702
  %704 = vrot.lane.b32.xlu0 %v701, 64
  %v705 = vpop.permute.xlu0 %704
  %706 = vrot.lane.b32.xlu0 %v701, 32
  %v707 = vpop.permute.xlu0 %706
  %v708 = vmul.f32 %v703, %v647
  %v709 = vmul.f32 %v701, %v705
  %v710 = vadd.f32 %v708, %v709
  %v711 = vtanh.pop %v710
  %v712 = vmul.f32 %v707, %v711
  %s713 = scalar_lea.vmem [#allocation3], 40
  %714 = vst [vmem:[%s713] sm:$0xff] %v712
  %v715 = vpack.c.bf16 %v712, %v712
  %s716 = scalar_lea.vmem [#allocation2], 48
  %v717 = vld [vmem:[%s716] sm:$0xff]
  %718 = vmatprep.subr.bf16.mxu0 0
  %719 = vmatpush1.bf16.msra.mxu0 %v325
  %720 = vmatprep.subr.bf16.mxu0 0
  %721 = vmatpush1.bf16.msra.mxu0 %v326
  %722 = vmatprep.subr.bf16.mxu0 0
  %723 = vmatpush1.bf16.msra.mxu0 %v327
  %724 = vmatprep.subr.bf16.mxu0 0
  %725 = vmatpush1.bf16.msra.mxu0 %v328
  %726 = vmatprep.subr.bf16.mxu0 0
  %727 = vmatpush1.bf16.msra.mxu0 %v329
  %728 = vmatprep.subr.bf16.mxu0 0
  %729 = vmatpush1.bf16.msra.mxu0 %v330
  %730 = vmatprep.subr.bf16.mxu0 0
  %731 = vmatpush1.bf16.msra.mxu0 %v331
  %732 = vmatprep.subr.bf16.mxu0 0
  %733 = vmatpush1.bf16.msra.mxu0 %v332
  %734 = vmatprep.subr.bf16.mxu0 0
  %735 = vmatpush1.bf16.msra.mxu0 0
  %736 = vmatprep.subr.bf16.mxu0 0
  %737 = vmatpush1.bf16.msra.mxu0 0
  %738 = vmatprep.subr.bf16.mxu0 0
  %739 = vmatpush1.bf16.msra.mxu0 0
  %740 = vmatprep.subr.bf16.mxu0 0
  %741 = vmatpush1.bf16.msra.mxu0 0
  %742 = vmatprep.subr.bf16.mxu0 0
  %743 = vmatpush1.bf16.msra.mxu0 0
  %744 = vmatprep.subr.bf16.mxu0 0
  %745 = vmatpush1.bf16.msra.mxu0 0
  %746 = vmatprep.subr.bf16.mxu0 0
  %747 = vmatpush1.bf16.msra.mxu0 0
  %748 = vmatprep.subr.bf16.mxu0 0
  %749 = vmatpush1.bf16.msra.mxu0 0
  %750 = vmatprep.mubr.bf16.mxu0 0
  %751 = vmatmul.mubr.bf16.gmra.mrb[0].mxu0 %v715
  %v752 = vpop.f32.mrb[0].mxu0
  %v753 = vadd.f32 0.0, %v752
  %v754 = vpop.f32.mrb[0].mxu0
  %v755 = vpop.f32.mrb[0].mxu0
  %v756 = vpop.f32.mrb[0].mxu0
  %757 = vdwg.mxu0
  %v758 = vadd.f32 %v717, %v753
  %v759 = vmul.f32 %v758, 0.5
  %v760 = vsel %vm291, %v758, %v759
  %v761 = vtanh.pop %v760
  %v762 = vmul.f32 %v761, 0.5
  %v763 = vadd.f32 %v762, 0.5
  %v764 = vsel %vm291, %v761, %v763
  %765 = vrot.lane.b32.xlu0 %v764, 96
  %v766 = vpop.permute.xlu0 %765
  %767 = vrot.lane.b32.xlu0 %v764, 64
  %v768 = vpop.permute.xlu0 %767
  %769 = vrot.lane.b32.xlu0 %v764, 32
  %v770 = vpop.permute.xlu0 %769
  %v771 = vmul.f32 %v766, %v710
  %v772 = vmul.f32 %v764, %v768
  %v773 = vadd.f32 %v771, %v772
  %v774 = vtanh.pop %v773
  %v775 = vmul.f32 %v770, %v774
  %s776 = scalar_lea.vmem [#allocation3], 48
  %777 = vst [vmem:[%s776] sm:$0xff] %v775
  %v778 = vpack.c.bf16 %v775, %v775
  %s779 = scalar_lea.vmem [#allocation2], 56
  %v780 = vld [vmem:[%s779] sm:$0xff]
  %781 = vmatprep.subr.bf16.mxu0 0
  %782 = vmatpush1.bf16.msra.mxu0 %v325
  %783 = vmatprep.subr.bf16.mxu0 0
  %784 = vmatpush1.bf16.msra.mxu0 %v326
  %785 = vmatprep.subr.bf16.mxu0 0
  %786 = vmatpush1.bf16.msra.mxu0 %v327
  %787 = vmatprep.subr.bf16.mxu0 0
  %788 = vmatpush1.bf16.msra.mxu0 %v328
  %789 = vmatprep.subr.bf16.mxu0 0
  %790 = vmatpush1.bf16.msra.mxu0 %v329
  %791 = vmatprep.subr.bf16.mxu0 0
  %792 = vmatpush1.bf16.msra.mxu0 %v330
  %793 = vmatprep.subr.bf16.mxu0 0
  %794 = vmatpush1.bf16.msra.mxu0 %v331
  %795 = vmatprep.subr.bf16.mxu0 0
  %796 = vmatpush1.bf16.msra.mxu0 %v332
  %797 = vmatprep.subr.bf16.mxu0 0
  %798 = vmatpush1.bf16.msra.mxu0 0
  %799 = vmatprep.subr.bf16.mxu0 0
  %800 = vmatpush1.bf16.msra.mxu0 0
  %801 = vmatprep.subr.bf16.mxu0 0
  %802 = vmatpush1.bf16.msra.mxu0 0
  %803 = vmatprep.subr.bf16.mxu0 0
  %804 = vmatpush1.bf16.msra.mxu0 0
  %805 = vmatprep.subr.bf16.mxu0 0
  %806 = vmatpush1.bf16.msra.mxu0 0
  %807 = vmatprep.subr.bf16.mxu0 0
  %808 = vmatpush1.bf16.msra.mxu0 0
  %809 = vmatprep.subr.bf16.mxu0 0
  %810 = vmatpush1.bf16.msra.mxu0 0
  %811 = vmatprep.subr.bf16.mxu0 0
  %812 = vmatpush1.bf16.msra.mxu0 0
  %813 = vmatprep.mubr.bf16.mxu0 0
  %814 = vmatmul.mubr.bf16.gmra.mrb[0].mxu0 %v778
  %v815 = vpop.f32.mrb[0].mxu0
  %v816 = vadd.f32 0.0, %v815
  %v817 = vpop.f32.mrb[0].mxu0
  %v818 = vpop.f32.mrb[0].mxu0
  %v819 = vpop.f32.mrb[0].mxu0
  %820 = vdwg.mxu0
  %v821 = vadd.f32 %v780, %v816
  %v822 = vmul.f32 %v821, 0.5
  %v823 = vsel %vm291, %v821, %v822
  %v824 = vtanh.pop %v823
  %v825 = vmul.f32 %v824, 0.5
  %v826 = vadd.f32 %v825, 0.5
  %v827 = vsel %vm291, %v824, %v826
  %828 = vrot.lane.b32.xlu0 %v827, 96
  %v829 = vpop.permute.xlu0 %828
  %830 = vrot.lane.b32.xlu0 %v827, 64
  %v831 = vpop.permute.xlu0 %830
  %832 = vrot.lane.b32.xlu0 %v827, 32
  %v833 = vpop.permute.xlu0 %832
  %v834 = vmul.f32 %v829, %v773
  %v835 = vmul.f32 %v827, %v831
  %v836 = vadd.f32 %v834, %v835
  %v837 = vtanh.pop %v836
  %v838 = vmul.f32 %v833, %v837
  %s839 = scalar_lea.vmem [#allocation3], 56
  %840 = vst [vmem:[%s839] sm:$0xff] %v838
  %v841 = vld [vmem:[#allocation3] sm:$0xff]
  %v842 = vld [vmem:[#allocation3 + $0x8] sm:$0xff]
  %v843 = vld [vmem:[#allocation3 + $0x10] sm:$0xff]
  %v844 = vld [vmem:[#allocation3 + $0x18] sm:$0xff]
  %v845 = vld [vmem:[#allocation3 + $0x20] sm:$0xff]
  %v846 = vld [vmem:[#allocation3 + $0x28] sm:$0xff]
  %v847 = vld [vmem:[#allocation3 + $0x30] sm:$0xff]
  %v848 = vld [vmem:[#allocation3 + $0x38] sm:$0xff]
  %v849 = vpack.c.bf16 %v842, %v841
  %v850 = vpack.c.bf16 %v844, %v843
  %v851 = vpack.c.bf16 %v846, %v845
  %v852 = vpack.c.bf16 %v848, %v847
  %v853 = vld [vmem:[%s4] sm:$0xf]
  %v854 = vld [vmem:[%s4 + $0x4] sm:$0xf]
  %v855 = vld [vmem:[%s4 + $0x8] sm:$0xf]
  %v856 = vld [vmem:[%s4 + $0xc] sm:$0xf]
  %v857 = vld [vmem:[%s4 + $0x10] sm:$0xf]
  %v858 = vld [vmem:[%s4 + $0x14] sm:$0xf]
  %v859 = vld [vmem:[%s4 + $0x18] sm:$0xf]
  %v860 = vld [vmem:[%s4 + $0x1c] sm:$0xf]
  %v861 = vld [vmem:[%s4 + $0x20] sm:$0xf]
  %v862 = vld [vmem:[%s4 + $0x24] sm:$0xf]
  %v863 = vld [vmem:[%s4 + $0x28] sm:$0xf]
  %v864 = vld [vmem:[%s4 + $0x2c] sm:$0xf]
  %v865 = vld [vmem:[%s4 + $0x30] sm:$0xf]
  %v866 = vld [vmem:[%s4 + $0x34] sm:$0xf]
  %v867 = vld [vmem:[%s4 + $0x38] sm:$0xf]
  %v868 = vld [vmem:[%s4 + $0x3c] sm:$0xf]
  %v869 = vld [vmem:[%s5] sm:$0x1]
  %v871 = vlaneseq
  %v872 = vshrl.u32 %v871, 7
  %v873 = vsub.s32 0, %v872
  %v874 = vrot.slane %v869, %v873
  %v892 = vunpack.c.l.b16 %v853
  %v893 = vunpack.c.l.b16 %v854
  %v894 = vunpack.c.l.b16 %v855
  %v895 = vunpack.c.l.b16 %v856
  %v896 = vunpack.c.l.b16 %v857
  %v897 = vunpack.c.l.b16 %v858
  %v898 = vunpack.c.l.b16 %v859
  %v899 = vunpack.c.l.b16 %v860
  %v900 = vunpack.c.l.b16 %v861
  %v901 = vunpack.c.l.b16 %v862
  %v902 = vunpack.c.l.b16 %v863
  %v903 = vunpack.c.l.b16 %v864
  %v904 = vunpack.c.l.b16 %v865
  %v905 = vunpack.c.l.b16 %v866
  %v906 = vunpack.c.l.b16 %v867
  %v907 = vunpack.c.l.b16 %v868
  %v908 = vpack.c.b16 %v893, %v892
  %v909 = vpack.c.b16 %v895, %v894
  %v910 = vpack.c.b16 %v897, %v896
  %v911 = vpack.c.b16 %v899, %v898
  %v912 = vpack.c.b16 %v901, %v900
  %v913 = vpack.c.b16 %v903, %v902
  %v914 = vpack.c.b16 %v905, %v904
  %v915 = vpack.c.b16 %v907, %v906
  %924 = vmatprep.subr.bf16.mxu0 0
  %925 = vmatpush1.bf16.msra.mxu0 %v908
  %926 = vmatprep.subr.bf16.mxu0 0
  %927 = vmatpush1.bf16.msra.mxu0 %v909
  %928 = vmatprep.subr.bf16.mxu0 0
  %929 = vmatpush1.bf16.msra.mxu0 %v910
  %930 = vmatprep.subr.bf16.mxu0 0
  %931 = vmatpush1.bf16.msra.mxu0 %v911
  %932 = vmatprep.subr.bf16.mxu0 0
  %933 = vmatpush1.bf16.msra.mxu0 %v912
  %934 = vmatprep.subr.bf16.mxu0 0
  %935 = vmatpush1.bf16.msra.mxu0 %v913
  %936 = vmatprep.subr.bf16.mxu0 0
  %937 = vmatpush1.bf16.msra.mxu0 %v914
  %938 = vmatprep.subr.bf16.mxu0 0
  %939 = vmatpush1.bf16.msra.mxu0 %v915
  %940 = vmatprep.subr.bf16.mxu0 0
  %941 = vmatpush1.bf16.msra.mxu0 0
  %942 = vmatprep.subr.bf16.mxu0 0
  %943 = vmatpush1.bf16.msra.mxu0 0
  %944 = vmatprep.subr.bf16.mxu0 0
  %945 = vmatpush1.bf16.msra.mxu0 0
  %946 = vmatprep.subr.bf16.mxu0 0
  %947 = vmatpush1.bf16.msra.mxu0 0
  %948 = vmatprep.subr.bf16.mxu0 0
  %949 = vmatpush1.bf16.msra.mxu0 0
  %950 = vmatprep.subr.bf16.mxu0 0
  %951 = vmatpush1.bf16.msra.mxu0 0
  %952 = vmatprep.subr.bf16.mxu0 0
  %953 = vmatpush1.bf16.msra.mxu0 0
  %954 = vmatprep.subr.bf16.mxu0 0
  %955 = vmatpush1.bf16.msra.mxu0 0
  %956 = vmatprep.mubr.bf16.mxu0 0
  %957 = vmatmul.mubr.bf16.gmra.mrb[0].mxu0 %v849
  %v958 = vpop.f32.mrb[0].mxu0
  %v959 = vadd.f32 %v874, %v958
  %v960 = vpop.f32.mrb[0].mxu0
  %v961 = vpop.f32.mrb[0].mxu0
  %v962 = vadd.f32 %v874, %v961
  %v963 = vpop.f32.mrb[0].mxu0
  %964 = vmatprep.mubr.bf16.mxu0 0
  %965 = vmatmul.mubr.bf16.gmra.mrb[0].mxu0 %v850
  %v966 = vpop.f32.mrb[0].mxu0
  %v967 = vadd.f32 %v874, %v966
  %v968 = vpop.f32.mrb[0].mxu0
  %v969 = vpop.f32.mrb[0].mxu0
  %v970 = vadd.f32 %v874, %v969
  %v971 = vpop.f32.mrb[0].mxu0
  %972 = vmatprep.mubr.bf16.mxu0 0
  %973 = vmatmul.mubr.bf16.gmra.mrb[0].mxu0 %v851
  %v974 = vpop.f32.mrb[0].mxu0
  %v975 = vadd.f32 %v874, %v974
  %v976 = vpop.f32.mrb[0].mxu0
  %v977 = vpop.f32.mrb[0].mxu0
  %v978 = vadd.f32 %v874, %v977
  %v979 = vpop.f32.mrb[0].mxu0
  %980 = vmatprep.mubr.bf16.mxu0 0
  %981 = vmatmul.mubr.bf16.gmra.mrb[0].mxu0 %v852
  %v982 = vpop.f32.mrb[0].mxu0
  %v983 = vadd.f32 %v874, %v982
  %v984 = vpop.f32.mrb[0].mxu0
  %v985 = vpop.f32.mrb[0].mxu0
  %v986 = vadd.f32 %v874, %v985
  %v987 = vpop.f32.mrb[0].mxu0
  %988 = vdwg.mxu0
  %989 = vst [vmem:[%s6] sm:$0xff] %v959
  %990 = vst [vmem:[%s6 + $0x8] sm:$0xff] %v962
  %991 = vst [vmem:[%s6 + $0x10] sm:$0xff] %v967
  %992 = vst [vmem:[%s6 + $0x18] sm:$0xff] %v970
  %993 = vst [vmem:[%s6 + $0x20] sm:$0xff] %v975
  %994 = vst [vmem:[%s6 + $0x28] sm:$0xff] %v978
  %995 = vst [vmem:[%s6 + $0x30] sm:$0xff] %v983
  %996 = vst [vmem:[%s6 + $0x38] sm:$0xff] %v986
  // Predicated region
  $region26: #{blitz_lstm_forward.1} parent=0 // pred_check
    _
  $region27: #{blitz_lstm_forward.1} parent=0 // pred_check_branch
    %998 = sbr.rel (0) target = $region29
  $region28: #{blitz_lstm_forward.1} parent=0 // pred_region
    _
  $region29: #{blitz_lstm_forward.1} parent=0 // pred_fallthru
    _
  // Predicated region
  $region30: #{blitz_lstm_forward.1} parent=0 // pred_check
    _
  $region31: #{blitz_lstm_forward.1} parent=0 // pred_check_branch
    %1000 = sbr.rel (0) target = $region33
  $region32: #{blitz_lstm_forward.1} parent=0 // pred_region
    _
  $region33: #{blitz_lstm_forward.1} parent=0 // pred_fallthru
    _

</llo_original>
